<compile_context>
chip_gen: v5e
topology: v5e:2x2
jax: 0.10.0
libtpu: 0.0.40
codegen_flags: <defaults>
</compile_context>

<pallas_src>
import jax
import jax.numpy as jnp
from jax.experimental import pallas as pl
from jax.experimental.pallas import tpu as pltpu

KH = KW = 4
STRIDE = 2
PAD = 1


def _round_up(x, m):
    return ((x + m - 1) // m) * m


def final_convt2d(img, weight, bias):
    """ConvTranspose2d(kernel=4, stride=2, padding=1) followed by tanh.

    img:    (N, C_in, H, W)      float32
    weight: (C_in, C_out, 4, 4)  float32   (PyTorch ConvTranspose2d layout)
    bias:   (C_out,)             float32
    returns (N, C_out, 2H, 2W)   float32
    """
    N, C_in, H, W = img.shape
    C_out = weight.shape[1]

    # Sub-pixel decomposition of ConvTranspose2d(k=4, s=2, p=1):
    #   out[n, co, 2p+rh, 2q+rw] = bias[co]
    #     + sum_{ci} sum_{dh,dw in {0,1}}
    #         weight[ci, co, 3-rh-2dh, 3-rw-2dw] * x_pad[n, ci, p+rh+dh, q+rw+dw]
    # with x_pad = img padded by 1 pixel on every side (no zero insertion).
    # Only 9 distinct shifted slabs (a, b) = (rh+dh, rw+dw) ever appear.
    Wp = W + 2                       # padded row width (2 junk lanes per row)
    L = H * Wp                       # flattened spatial extent per parity
    Lp = _round_up(L, 128)           # lane-dense output width (unmasked store)
    S = 2 * Wp + 2 + Lp              # padded flat slab length: covers the
                                     # deepest shifted read (offset 2*Wp+2, len Lp)
    CO4 = 4 * C_out
    CI9 = 9 * C_in

    # ---- weight / bias re-layout (tiny, trace-time) --------------------------
    # w_fused[(2*rh+rw)*C_out + co, (3*(rh+dh)+(rw+dw))*C_in + ci]
    #   = weight[ci, co, 3-rh-2dh, 3-rw-2dw]       (zero for unused tap columns)
    w_fused = jnp.zeros((CO4, CI9), jnp.float32)
    for rh in range(2):
        for rw in range(2):
            for dh in range(2):
                for dw in range(2):
                    a, b = rh + dh, rw + dw
                    blk = weight[:, :, 3 - rh - 2 * dh, 3 - rw - 2 * dw].T
                    r0 = (2 * rh + rw) * C_out
                    c0 = (3 * a + b) * C_in
                    w_fused = w_fused.at[r0:r0 + C_out, c0:c0 + C_in].set(blk)
    b_fused = jnp.tile(bias, 4).reshape(CO4, 1)

    def kernel(x_ref, w_ref, b_ref, o_ref, pad_ref, rhs_ref):
        # x_ref: (1, C_in, H, W)   w_ref: (CO4, CI9)   b_ref: (CO4, 1)
        # o_ref: (1, CO4, Lp)
        # pad_ref: (C_in, S) padded flat slab   rhs_ref: (CI9, Lp) stacked taps
        #
        # Build the 1-pixel-padded flat slab in VMEM (no HBM-side pad pass).
        # Re-zeroed every step so the border is correct regardless of which
        # core / grid step touches this per-core scratch first.
        pad_ref[...] = jnp.zeros_like(pad_ref)
        for h in range(H):                       # static, unrolled interior copy
            pad_ref[:, pl.ds((h + 1) * Wp + 1, W)] = x_ref[0, :, h, :]

        # Stack the 9 deduplicated shifted slabs once (one relayout copy each),
        # then contract all parities in a single MXU push.
        for a in range(3):
            for b in range(3):
                t = 3 * a + b
                rhs_ref[pl.ds(t * C_in, C_in), :] = pad_ref[:, pl.ds(a * Wp + b, Lp)]

        acc = jnp.dot(w_ref[...], rhs_ref[...],
                      preferred_element_type=jnp.float32)      # (CO4, Lp)
        o_ref[0, :, :] = jnp.tanh(acc + b_ref[...])

    # Explicit scoped-VMEM limit (v5e default is only 16 MiB); capped at v7x's
    # 64 MiB physical VMEM.
    vmem_bytes = 4 * (2 * C_in * H * W            # double-buffered input block
                      + 2 * CO4 * Lp              # double-buffered output block
                      + C_in * S                  # padded slab scratch
                      + CI9 * Lp                  # stacked RHS scratch
                      + CO4 * (CI9 + 1))          # weights + bias
    vmem_limit = int(min(max(vmem_bytes + (8 << 20), 32 << 20), 64 << 20))

    out = pl.pallas_call(
        kernel,
        out_shape=jax.ShapeDtypeStruct((N, CO4, Lp), jnp.float32),
        grid_spec=pltpu.PrefetchScalarGridSpec(
            num_scalar_prefetch=0,
            grid=(N,),
            in_specs=[
                pl.BlockSpec((1, C_in, H, W), lambda n: (n, 0, 0, 0)),  # sample
                pl.BlockSpec((CO4, CI9), lambda n: (0, 0)),             # weights
                pl.BlockSpec((CO4, 1), lambda n: (0, 0)),               # bias
            ],
            out_specs=pl.BlockSpec((1, CO4, Lp), lambda n: (n, 0, 0)),
            scratch_shapes=[
                pltpu.VMEM((C_in, S), jnp.float32),    # padded flat input slab
                pltpu.VMEM((CI9, Lp), jnp.float32),    # stacked 9-tap RHS
            ],
        ),
        compiler_params=pltpu.CompilerParams(
            dimension_semantics=("parallel",),     # batch over v7x's 2 TCs
            vmem_limit_bytes=vmem_limit),
    )(img, w_fused, b_fused)

    # ---- un-scramble to NCHW: one fused slice+transpose on the output -------
    out = out[:, :, :L].reshape(N, 2, 2, C_out, H, Wp)[..., :W]  # drop junk lanes
    out = out.transpose(0, 3, 4, 1, 5, 2)                        # (N,C_out,H,rh,W,rw)
    return out.reshape(N, C_out, 2 * H, 2 * W)


def _reference(img, weight, bias):
    """Pure-JAX reference for ConvTranspose2d(k=4, s=2, p=1) + tanh."""
    w_conv = jnp.flip(weight, axis=(2, 3)).transpose(1, 0, 2, 3)  # (C_out, C_in, 4, 4)
    y = jax.lax.conv_general_dilated(
        img, w_conv,
        window_strides=(1, 1),
        padding=((KH - 1 - PAD, KH - 1 - PAD), (KW - 1 - PAD, KW - 1 - PAD)),
        lhs_dilation=(STRIDE, STRIDE),
        dimension_numbers=("NCHW", "OIHW", "NCHW"),
    )
    return jnp.tanh(y + bias[None, :, None, None])


if __name__ == "__main__":
    # Small shapes consistent with the module: in_feat=4, channel=3.
    N, C_in, H, W = 2, 4, 16, 16
    C_out = 3

    key = jax.random.PRNGKey(0)
    k_img, k_w, k_b = jax.random.split(key, 3)
    img = jax.random.normal(k_img, (N, C_in, H, W), dtype=jnp.float32)
    bound = 1.0 / float(jnp.sqrt(C_in * KH * KW))
    weight = jax.random.uniform(k_w, (C_in, C_out, KH, KW),
                                minval=-bound, maxval=bound, dtype=jnp.float32)
    bias = jax.random.uniform(k_b, (C_out,),
                              minval=-bound, maxval=bound, dtype=jnp.float32)

    fn = jax.jit(final_convt2d)
    out = jax.block_until_ready(fn(img, weight, bias))

    ref = jax.block_until_ready(_reference(img, weight, bias))
    assert out.shape == (N, C_out, 2 * H, 2 * W), out.shape
    assert jnp.allclose(out, ref, atol=1e-3, rtol=1e-3), "mismatch vs reference"

    print("KERNEL_OK")
</pallas_src>

<mosaic_0001>
module attributes {stable_mosaic.version = 11 : i64} {
  func.func @kernel(%arg0: i32, %arg1: memref<1x4x16x16xf32, #tpu.memory_space<vmem>>, %arg2: memref<12x36xf32, #tpu.memory_space<vmem>>, %arg3: memref<12x1xf32, #tpu.memory_space<vmem>>, %arg4: memref<1x12x384xf32, #tpu.memory_space<vmem>>, %arg5: memref<4x422xf32, #tpu.memory_space<vmem>>, %arg6: memref<36x384xf32, #tpu.memory_space<vmem>>) attributes {dimension_semantics = [#tpu.dimension_semantics<parallel>], iteration_bounds = array<i64: 2>, scalar_prefetch = 0 : i64, scratch_operands = 2 : i64, tpu.core_type = #tpu.core_type<tc>, window_params = [{transform_indices = @transform_0, window_bounds = array<i64: 1, 4, 16, 16>}, {pipeline_mode = #tpu.pipeline_mode<synchronous>, transform_indices = @transform_1, window_bounds = array<i64: 12, 36>}, {pipeline_mode = #tpu.pipeline_mode<synchronous>, transform_indices = @transform_2, window_bounds = array<i64: 12, 1>}, {transform_indices = @transform_3, window_bounds = array<i64: 1, 12, 384>}]} {
    %cst = arith.constant 0.000000e+00 : f32
    %0 = vector.broadcast %cst : f32 to vector<4x422xf32>
    %c0 = arith.constant 0 : index
    %c0_0 = arith.constant 0 : index
    %1 = vector.load %arg5[%c0, %c0_0] : memref<4x422xf32, #tpu.memory_space<vmem>>, vector<4x422xf32>
    tpu.vector_store %arg5[%c0, %c0_0], %0 {strides = array<i32>} : memref<4x422xf32, #tpu.memory_space<vmem>>, vector<4x422xf32>,
    %c0_1 = arith.constant 0 : index
    %c0_2 = arith.constant 0 : index
    %c0_3 = arith.constant 0 : index
    %c0_4 = arith.constant 0 : index
    %2 = vector.load %arg1[%c0_1, %c0_2, %c0_3, %c0_4] : memref<1x4x16x16xf32, #tpu.memory_space<vmem>>, vector<1x4x1x16xf32>
    %3 = vector.shape_cast %2 : vector<1x4x1x16xf32> to vector<4x16xf32>
    %c0_5 = arith.constant 0 : index
    %c19 = arith.constant 19 : index
    %4 = vector.load %arg5[%c0_5, %c19] : memref<4x422xf32, #tpu.memory_space<vmem>>, vector<4x16xf32>
    tpu.vector_store %arg5[%c0_5, %c19], %3 {strides = array<i32>} : memref<4x422xf32, #tpu.memory_space<vmem>>, vector<4x16xf32>,
    %c0_6 = arith.constant 0 : index
    %c0_7 = arith.constant 0 : index
    %c1 = arith.constant 1 : index
    %c0_8 = arith.constant 0 : index
    %5 = vector.load %arg1[%c0_6, %c0_7, %c1, %c0_8] : memref<1x4x16x16xf32, #tpu.memory_space<vmem>>, vector<1x4x1x16xf32>
    %6 = vector.shape_cast %5 : vector<1x4x1x16xf32> to vector<4x16xf32>
    %c0_9 = arith.constant 0 : index
    %c37 = arith.constant 37 : index
    %7 = vector.load %arg5[%c0_9, %c37] : memref<4x422xf32, #tpu.memory_space<vmem>>, vector<4x16xf32>
    tpu.vector_store %arg5[%c0_9, %c37], %6 {strides = array<i32>} : memref<4x422xf32, #tpu.memory_space<vmem>>, vector<4x16xf32>,
    %c0_10 = arith.constant 0 : index
    %c0_11 = arith.constant 0 : index
    %c2 = arith.constant 2 : index
    %c0_12 = arith.constant 0 : index
    %8 = vector.load %arg1[%c0_10, %c0_11, %c2, %c0_12] : memref<1x4x16x16xf32, #tpu.memory_space<vmem>>, vector<1x4x1x16xf32>
    %9 = vector.shape_cast %8 : vector<1x4x1x16xf32> to vector<4x16xf32>
    %c0_13 = arith.constant 0 : index
    %c55 = arith.constant 55 : index
    %10 = vector.load %arg5[%c0_13, %c55] : memref<4x422xf32, #tpu.memory_space<vmem>>, vector<4x16xf32>
    tpu.vector_store %arg5[%c0_13, %c55], %9 {strides = array<i32>} : memref<4x422xf32, #tpu.memory_space<vmem>>, vector<4x16xf32>,
    %c0_14 = arith.constant 0 : index
    %c0_15 = arith.constant 0 : index
    %c3 = arith.constant 3 : index
    %c0_16 = arith.constant 0 : index
    %11 = vector.load %arg1[%c0_14, %c0_15, %c3, %c0_16] : memref<1x4x16x16xf32, #tpu.memory_space<vmem>>, vector<1x4x1x16xf32>
    %12 = vector.shape_cast %11 : vector<1x4x1x16xf32> to vector<4x16xf32>
    %c0_17 = arith.constant 0 : index
    %c73 = arith.constant 73 : index
    %13 = vector.load %arg5[%c0_17, %c73] : memref<4x422xf32, #tpu.memory_space<vmem>>, vector<4x16xf32>
    tpu.vector_store %arg5[%c0_17, %c73], %12 {strides = array<i32>} : memref<4x422xf32, #tpu.memory_space<vmem>>, vector<4x16xf32>,
    %c0_18 = arith.constant 0 : index
    %c0_19 = arith.constant 0 : index
    %c4 = arith.constant 4 : index
    %c0_20 = arith.constant 0 : index
    %14 = vector.load %arg1[%c0_18, %c0_19, %c4, %c0_20] : memref<1x4x16x16xf32, #tpu.memory_space<vmem>>, vector<1x4x1x16xf32>
    %15 = vector.shape_cast %14 : vector<1x4x1x16xf32> to vector<4x16xf32>
    %c0_21 = arith.constant 0 : index
    %c91 = arith.constant 91 : index
    %16 = vector.load %arg5[%c0_21, %c91] : memref<4x422xf32, #tpu.memory_space<vmem>>, vector<4x16xf32>
    tpu.vector_store %arg5[%c0_21, %c91], %15 {strides = array<i32>} : memref<4x422xf32, #tpu.memory_space<vmem>>, vector<4x16xf32>,
    %c0_22 = arith.constant 0 : index
    %c0_23 = arith.constant 0 : index
    %c5 = arith.constant 5 : index
    %c0_24 = arith.constant 0 : index
    %17 = vector.load %arg1[%c0_22, %c0_23, %c5, %c0_24] : memref<1x4x16x16xf32, #tpu.memory_space<vmem>>, vector<1x4x1x16xf32>
    %18 = vector.shape_cast %17 : vector<1x4x1x16xf32> to vector<4x16xf32>
    %c0_25 = arith.constant 0 : index
    %c109 = arith.constant 109 : index
    %19 = vector.load %arg5[%c0_25, %c109] : memref<4x422xf32, #tpu.memory_space<vmem>>, vector<4x16xf32>
    tpu.vector_store %arg5[%c0_25, %c109], %18 {strides = array<i32>} : memref<4x422xf32, #tpu.memory_space<vmem>>, vector<4x16xf32>,
    %c0_26 = arith.constant 0 : index
    %c0_27 = arith.constant 0 : index
    %c6 = arith.constant 6 : index
    %c0_28 = arith.constant 0 : index
    %20 = vector.load %arg1[%c0_26, %c0_27, %c6, %c0_28] : memref<1x4x16x16xf32, #tpu.memory_space<vmem>>, vector<1x4x1x16xf32>
    %21 = vector.shape_cast %20 : vector<1x4x1x16xf32> to vector<4x16xf32>
    %c0_29 = arith.constant 0 : index
    %c127 = arith.constant 127 : index
    %22 = vector.load %arg5[%c0_29, %c127] : memref<4x422xf32, #tpu.memory_space<vmem>>, vector<4x16xf32>
    tpu.vector_store %arg5[%c0_29, %c127], %21 {strides = array<i32>} : memref<4x422xf32, #tpu.memory_space<vmem>>, vector<4x16xf32>,
    %c0_30 = arith.constant 0 : index
    %c0_31 = arith.constant 0 : index
    %c7 = arith.constant 7 : index
    %c0_32 = arith.constant 0 : index
    %23 = vector.load %arg1[%c0_30, %c0_31, %c7, %c0_32] : memref<1x4x16x16xf32, #tpu.memory_space<vmem>>, vector<1x4x1x16xf32>
    %24 = vector.shape_cast %23 : vector<1x4x1x16xf32> to vector<4x16xf32>
    %c0_33 = arith.constant 0 : index
    %c145 = arith.constant 145 : index
    %25 = vector.load %arg5[%c0_33, %c145] : memref<4x422xf32, #tpu.memory_space<vmem>>, vector<4x16xf32>
    tpu.vector_store %arg5[%c0_33, %c145], %24 {strides = array<i32>} : memref<4x422xf32, #tpu.memory_space<vmem>>, vector<4x16xf32>,
    %c0_34 = arith.constant 0 : index
    %c0_35 = arith.constant 0 : index
    %c8 = arith.constant 8 : index
    %c0_36 = arith.constant 0 : index
    %26 = vector.load %arg1[%c0_34, %c0_35, %c8, %c0_36] : memref<1x4x16x16xf32, #tpu.memory_space<vmem>>, vector<1x4x1x16xf32>
    %27 = vector.shape_cast %26 : vector<1x4x1x16xf32> to vector<4x16xf32>
    %c0_37 = arith.constant 0 : index
    %c163 = arith.constant 163 : index
    %28 = vector.load %arg5[%c0_37, %c163] : memref<4x422xf32, #tpu.memory_space<vmem>>, vector<4x16xf32>
    tpu.vector_store %arg5[%c0_37, %c163], %27 {strides = array<i32>} : memref<4x422xf32, #tpu.memory_space<vmem>>, vector<4x16xf32>,
    %c0_38 = arith.constant 0 : index
    %c0_39 = arith.constant 0 : index
    %c9 = arith.constant 9 : index
    %c0_40 = arith.constant 0 : index
    %29 = vector.load %arg1[%c0_38, %c0_39, %c9, %c0_40] : memref<1x4x16x16xf32, #tpu.memory_space<vmem>>, vector<1x4x1x16xf32>
    %30 = vector.shape_cast %29 : vector<1x4x1x16xf32> to vector<4x16xf32>
    %c0_41 = arith.constant 0 : index
    %c181 = arith.constant 181 : index
    %31 = vector.load %arg5[%c0_41, %c181] : memref<4x422xf32, #tpu.memory_space<vmem>>, vector<4x16xf32>
    tpu.vector_store %arg5[%c0_41, %c181], %30 {strides = array<i32>} : memref<4x422xf32, #tpu.memory_space<vmem>>, vector<4x16xf32>,
    %c0_42 = arith.constant 0 : index
    %c0_43 = arith.constant 0 : index
    %c10 = arith.constant 10 : index
    %c0_44 = arith.constant 0 : index
    %32 = vector.load %arg1[%c0_42, %c0_43, %c10, %c0_44] : memref<1x4x16x16xf32, #tpu.memory_space<vmem>>, vector<1x4x1x16xf32>
    %33 = vector.shape_cast %32 : vector<1x4x1x16xf32> to vector<4x16xf32>
    %c0_45 = arith.constant 0 : index
    %c199 = arith.constant 199 : index
    %34 = vector.load %arg5[%c0_45, %c199] : memref<4x422xf32, #tpu.memory_space<vmem>>, vector<4x16xf32>
    tpu.vector_store %arg5[%c0_45, %c199], %33 {strides = array<i32>} : memref<4x422xf32, #tpu.memory_space<vmem>>, vector<4x16xf32>,
    %c0_46 = arith.constant 0 : index
    %c0_47 = arith.constant 0 : index
    %c11 = arith.constant 11 : index
    %c0_48 = arith.constant 0 : index
    %35 = vector.load %arg1[%c0_46, %c0_47, %c11, %c0_48] : memref<1x4x16x16xf32, #tpu.memory_space<vmem>>, vector<1x4x1x16xf32>
    %36 = vector.shape_cast %35 : vector<1x4x1x16xf32> to vector<4x16xf32>
    %c0_49 = arith.constant 0 : index
    %c217 = arith.constant 217 : index
    %37 = vector.load %arg5[%c0_49, %c217] : memref<4x422xf32, #tpu.memory_space<vmem>>, vector<4x16xf32>
    tpu.vector_store %arg5[%c0_49, %c217], %36 {strides = array<i32>} : memref<4x422xf32, #tpu.memory_space<vmem>>, vector<4x16xf32>,
    %c0_50 = arith.constant 0 : index
    %c0_51 = arith.constant 0 : index
    %c12 = arith.constant 12 : index
    %c0_52 = arith.constant 0 : index
    %38 = vector.load %arg1[%c0_50, %c0_51, %c12, %c0_52] : memref<1x4x16x16xf32, #tpu.memory_space<vmem>>, vector<1x4x1x16xf32>
    %39 = vector.shape_cast %38 : vector<1x4x1x16xf32> to vector<4x16xf32>
    %c0_53 = arith.constant 0 : index
    %c235 = arith.constant 235 : index
    %40 = vector.load %arg5[%c0_53, %c235] : memref<4x422xf32, #tpu.memory_space<vmem>>, vector<4x16xf32>
    tpu.vector_store %arg5[%c0_53, %c235], %39 {strides = array<i32>} : memref<4x422xf32, #tpu.memory_space<vmem>>, vector<4x16xf32>,
    %c0_54 = arith.constant 0 : index
    %c0_55 = arith.constant 0 : index
    %c13 = arith.constant 13 : index
    %c0_56 = arith.constant 0 : index
    %41 = vector.load %arg1[%c0_54, %c0_55, %c13, %c0_56] : memref<1x4x16x16xf32, #tpu.memory_space<vmem>>, vector<1x4x1x16xf32>
    %42 = vector.shape_cast %41 : vector<1x4x1x16xf32> to vector<4x16xf32>
    %c0_57 = arith.constant 0 : index
    %c253 = arith.constant 253 : index
    %43 = vector.load %arg5[%c0_57, %c253] : memref<4x422xf32, #tpu.memory_space<vmem>>, vector<4x16xf32>
    tpu.vector_store %arg5[%c0_57, %c253], %42 {strides = array<i32>} : memref<4x422xf32, #tpu.memory_space<vmem>>, vector<4x16xf32>,
    %c0_58 = arith.constant 0 : index
    %c0_59 = arith.constant 0 : index
    %c14 = arith.constant 14 : index
    %c0_60 = arith.constant 0 : index
    %44 = vector.load %arg1[%c0_58, %c0_59, %c14, %c0_60] : memref<1x4x16x16xf32, #tpu.memory_space<vmem>>, vector<1x4x1x16xf32>
    %45 = vector.shape_cast %44 : vector<1x4x1x16xf32> to vector<4x16xf32>
    %c0_61 = arith.constant 0 : index
    %c271 = arith.constant 271 : index
    %46 = vector.load %arg5[%c0_61, %c271] : memref<4x422xf32, #tpu.memory_space<vmem>>, vector<4x16xf32>
    tpu.vector_store %arg5[%c0_61, %c271], %45 {strides = array<i32>} : memref<4x422xf32, #tpu.memory_space<vmem>>, vector<4x16xf32>,
    %c0_62 = arith.constant 0 : index
    %c0_63 = arith.constant 0 : index
    %c15 = arith.constant 15 : index
    %c0_64 = arith.constant 0 : index
    %47 = vector.load %arg1[%c0_62, %c0_63, %c15, %c0_64] : memref<1x4x16x16xf32, #tpu.memory_space<vmem>>, vector<1x4x1x16xf32>
    %48 = vector.shape_cast %47 : vector<1x4x1x16xf32> to vector<4x16xf32>
    %c0_65 = arith.constant 0 : index
    %c289 = arith.constant 289 : index
    %49 = vector.load %arg5[%c0_65, %c289] : memref<4x422xf32, #tpu.memory_space<vmem>>, vector<4x16xf32>
    tpu.vector_store %arg5[%c0_65, %c289], %48 {strides = array<i32>} : memref<4x422xf32, #tpu.memory_space<vmem>>, vector<4x16xf32>,
    %c0_66 = arith.constant 0 : index
    %c0_67 = arith.constant 0 : index
    %50 = vector.load %arg5[%c0_66, %c0_67] : memref<4x422xf32, #tpu.memory_space<vmem>>, vector<4x384xf32>
    %c0_68 = arith.constant 0 : index
    %c0_69 = arith.constant 0 : index
    %51 = vector.load %arg6[%c0_68, %c0_69] : memref<36x384xf32, #tpu.memory_space<vmem>>, vector<4x384xf32>
    tpu.vector_store %arg6[%c0_68, %c0_69], %50 {strides = array<i32>} : memref<36x384xf32, #tpu.memory_space<vmem>>, vector<4x384xf32>,
    %c0_70 = arith.constant 0 : index
    %c1_71 = arith.constant 1 : index
    %52 = vector.load %arg5[%c0_70, %c1_71] : memref<4x422xf32, #tpu.memory_space<vmem>>, vector<4x384xf32>
    %c4_72 = arith.constant 4 : index
    %c0_73 = arith.constant 0 : index
    %53 = vector.load %arg6[%c4_72, %c0_73] : memref<36x384xf32, #tpu.memory_space<vmem>>, vector<4x384xf32>
    tpu.vector_store %arg6[%c4_72, %c0_73], %52 {strides = array<i32>} : memref<36x384xf32, #tpu.memory_space<vmem>>, vector<4x384xf32>,
    %c0_74 = arith.constant 0 : index
    %c2_75 = arith.constant 2 : index
    %54 = vector.load %arg5[%c0_74, %c2_75] : memref<4x422xf32, #tpu.memory_space<vmem>>, vector<4x384xf32>
    %c8_76 = arith.constant 8 : index
    %c0_77 = arith.constant 0 : index
    %55 = vector.load %arg6[%c8_76, %c0_77] : memref<36x384xf32, #tpu.memory_space<vmem>>, vector<4x384xf32>
    tpu.vector_store %arg6[%c8_76, %c0_77], %54 {strides = array<i32>} : memref<36x384xf32, #tpu.memory_space<vmem>>, vector<4x384xf32>,
    %c0_78 = arith.constant 0 : index
    %c18 = arith.constant 18 : index
    %56 = vector.load %arg5[%c0_78, %c18] : memref<4x422xf32, #tpu.memory_space<vmem>>, vector<4x384xf32>
    %c12_79 = arith.constant 12 : index
    %c0_80 = arith.constant 0 : index
    %57 = vector.load %arg6[%c12_79, %c0_80] : memref<36x384xf32, #tpu.memory_space<vmem>>, vector<4x384xf32>
    tpu.vector_store %arg6[%c12_79, %c0_80], %56 {strides = array<i32>} : memref<36x384xf32, #tpu.memory_space<vmem>>, vector<4x384xf32>,
    %c0_81 = arith.constant 0 : index
    %c19_82 = arith.constant 19 : index
    %58 = vector.load %arg5[%c0_81, %c19_82] : memref<4x422xf32, #tpu.memory_space<vmem>>, vector<4x384xf32>
    %c16 = arith.constant 16 : index
    %c0_83 = arith.constant 0 : index
    %59 = vector.load %arg6[%c16, %c0_83] : memref<36x384xf32, #tpu.memory_space<vmem>>, vector<4x384xf32>
    tpu.vector_store %arg6[%c16, %c0_83], %58 {strides = array<i32>} : memref<36x384xf32, #tpu.memory_space<vmem>>, vector<4x384xf32>,
    %c0_84 = arith.constant 0 : index
    %c20 = arith.constant 20 : index
    %60 = vector.load %arg5[%c0_84, %c20] : memref<4x422xf32, #tpu.memory_space<vmem>>, vector<4x384xf32>
    %c20_85 = arith.constant 20 : index
    %c0_86 = arith.constant 0 : index
    %61 = vector.load %arg6[%c20_85, %c0_86] : memref<36x384xf32, #tpu.memory_space<vmem>>, vector<4x384xf32>
    tpu.vector_store %arg6[%c20_85, %c0_86], %60 {strides = array<i32>} : memref<36x384xf32, #tpu.memory_space<vmem>>, vector<4x384xf32>,
    %c0_87 = arith.constant 0 : index
    %c36 = arith.constant 36 : index
    %62 = vector.load %arg5[%c0_87, %c36] : memref<4x422xf32, #tpu.memory_space<vmem>>, vector<4x384xf32>
    %c24 = arith.constant 24 : index
    %c0_88 = arith.constant 0 : index
    %63 = vector.load %arg6[%c24, %c0_88] : memref<36x384xf32, #tpu.memory_space<vmem>>, vector<4x384xf32>
    tpu.vector_store %arg6[%c24, %c0_88], %62 {strides = array<i32>} : memref<36x384xf32, #tpu.memory_space<vmem>>, vector<4x384xf32>,
    %c0_89 = arith.constant 0 : index
    %c37_90 = arith.constant 37 : index
    %64 = vector.load %arg5[%c0_89, %c37_90] : memref<4x422xf32, #tpu.memory_space<vmem>>, vector<4x384xf32>
    %c28 = arith.constant 28 : index
    %c0_91 = arith.constant 0 : index
    %65 = vector.load %arg6[%c28, %c0_91] : memref<36x384xf32, #tpu.memory_space<vmem>>, vector<4x384xf32>
    tpu.vector_store %arg6[%c28, %c0_91], %64 {strides = array<i32>} : memref<36x384xf32, #tpu.memory_space<vmem>>, vector<4x384xf32>,
    %c0_92 = arith.constant 0 : index
    %c38 = arith.constant 38 : index
    %66 = vector.load %arg5[%c0_92, %c38] : memref<4x422xf32, #tpu.memory_space<vmem>>, vector<4x384xf32>
    %c32 = arith.constant 32 : index
    %c0_93 = arith.constant 0 : index
    %67 = vector.load %arg6[%c32, %c0_93] : memref<36x384xf32, #tpu.memory_space<vmem>>, vector<4x384xf32>
    tpu.vector_store %arg6[%c32, %c0_93], %66 {strides = array<i32>} : memref<36x384xf32, #tpu.memory_space<vmem>>, vector<4x384xf32>,
    %c0_94 = arith.constant 0 : index
    %c0_95 = arith.constant 0 : index
    %68 = vector.load %arg2[%c0_94, %c0_95] : memref<12x36xf32, #tpu.memory_space<vmem>>, vector<12x36xf32>
    %c0_96 = arith.constant 0 : index
    %c0_97 = arith.constant 0 : index
    %69 = vector.load %arg6[%c0_96, %c0_97] : memref<36x384xf32, #tpu.memory_space<vmem>>, vector<36x384xf32>
    %cst_98 = arith.constant dense<0.000000e+00> : vector<12x384xf32>
    %70 = tpu.matmul %68, %69, %cst_98 {dimension_numbers = #tpu.dot_dimension_numbers<[1], [0], [0], [1], [0, 0, 1, 1], [], []>} : vector<12x36xf32>, vector<36x384xf32>, vector<12x384xf32> -> vector<12x384xf32>
    %c0_99 = arith.constant 0 : index
    %c0_100 = arith.constant 0 : index
    %71 = vector.load %arg3[%c0_99, %c0_100] : memref<12x1xf32, #tpu.memory_space<vmem>>, vector<12x1xf32>
    %72 = vector.broadcast %71 : vector<12x1xf32> to vector<12x384xf32>
    %73 = arith.addf %70, %72 : vector<12x384xf32>
    %74 = math.tanh %73 : vector<12x384xf32>
    %c0_101 = arith.constant 0 : index
    %c0_102 = arith.constant 0 : index
    %c0_103 = arith.constant 0 : index
    %75 = vector.load %arg4[%c0_101, %c0_102, %c0_103] : memref<1x12x384xf32, #tpu.memory_space<vmem>>, vector<1x12x384xf32>
    %76 = vector.shape_cast %75 : vector<1x12x384xf32> to vector<12x384xf32>
    %77 = vector.shape_cast %74 : vector<12x384xf32> to vector<1x12x384xf32>
    tpu.vector_store %arg4[%c0_101, %c0_102, %c0_103], %77 {strides = array<i32>} : memref<1x12x384xf32, #tpu.memory_space<vmem>>, vector<1x12x384xf32>,
    return
  }
  func.func @transform_0(%arg0: i32) -> (i32, i32, i32, i32) {
    %c0_i32 = arith.constant 0 : i32
    %c0_i32_0 = arith.constant 0 : i32
    %c0_i32_1 = arith.constant 0 : i32
    %c0_i32_2 = arith.constant 0 : i32
    return %arg0, %c0_i32, %c0_i32_0, %c0_i32_1 : i32, i32, i32, i32
  }
  func.func @transform_1(%arg0: i32) -> (i32, i32) {
    %c0_i32 = arith.constant 0 : i32
    %c0_i32_0 = arith.constant 0 : i32
    %c0_i32_1 = arith.constant 0 : i32
    return %c0_i32, %c0_i32_0 : i32, i32
  }
  func.func @transform_2(%arg0: i32) -> (i32, i32) {
    %c0_i32 = arith.constant 0 : i32
    %c0_i32_0 = arith.constant 0 : i32
    %c0_i32_1 = arith.constant 0 : i32
    return %c0_i32, %c0_i32_0 : i32, i32
  }
  func.func @transform_3(%arg0: i32) -> (i32, i32, i32) {
    %c0_i32 = arith.constant 0 : i32
    %c0_i32_0 = arith.constant 0 : i32
    %c0_i32_1 = arith.constant 0 : i32
    return %arg0, %c0_i32, %c0_i32_0 : i32, i32, i32
  }
}

</mosaic_0001>

<llo_original>
// kernel: tile.8
$region0: #{tile.8}
  #allocation2 [shape = 's32[1]{0}', space=sflag, size = 0x4, scoped, tag = 'scoped memory for tile.8']
  %s0 = inlined_call_operand.hbm [shape: f32[3], index: 0, kind: input, shape index: {}]
  %s1 = inlined_call_operand.vmem [shape: f32[4,3], index: 1, kind: output, shape index: {}]
  $region1: #{tile.8} parent=0
    #allocation0 [shape = 'u8[512]{0}', space=vmem, size = 0x400, scoped, tag = 'operand span for operand 0']
    #allocation1 [shape = 's32[1]{0}', space=sflag, size = 0x4, scoped, tag = 'scoped memory for tile.8']
    %2 = vsyncpa [#allocation1], 0
    // Predicated region
    $region2: #{tile.8} parent=1 // pred_check
      _
    $region3: #{tile.8} parent=1 // pred_check_branch
      %4 = sbr.rel (0) target = $region5
    $region4: #{tile.8} parent=1 // pred_region
      %6 = vsyncadd [#allocation1], 0
      %s8 = sshll.u32 %s0, 4
      %s9 = int_to_ptr.hbm [resolvable:$true] %s8
      %s10 = sshll.u32 [#allocation0], 4
      %s11 = int_to_ptr.vmem [resolvable:$true] %s10
      %13 = dma.hbm_to_vmem [thread:$0]  %s9, 16, %s11, [#allocation1]
    $region5: #{tile.8} parent=1 // pred_fallthru
      _
    // Predicated region
    $region6: #{tile.8} parent=1 // pred_check
      _
    $region7: #{tile.8} parent=1 // pred_check_branch
      %15 = sbr.rel (0) target = $region9
    $region8: #{tile.8} parent=1 // pred_region
      %17 = dma.done [#allocation1], 16
    $region9: #{tile.8} parent=1 // pred_fallthru
      _
    %v18 = vld [vmem:[#allocation0] ss:$0 sm:$0xff]
    %19 = vst [vmem:[%s1] sm:$0xf] %v18
    %20 = vsyncpa [#allocation1], 1

// kernel: tile.0
$region0: #{tile.0}
  %s0 = inlined_call_operand.vmem [shape: f32[4,3], index: 0, kind: input, shape index: {}]
  %s1 = inlined_call_operand.vmem [shape: f32[12,1], index: 1, kind: output, shape index: {}]
  $region1: #{tile.0} parent=0
    #allocation0 [shape = 'u8[4096]{0}', space=vmem, size = 0x1000, scoped, tag = 'scoped mem for input reshape']
    %s3 = ssub.s32 16, 1
    %v4 = vld [vmem:[%s0] sm:%s3]
    %5 = vst [vmem:[#allocation0] sm:%s3] %v4
    %v6 = vld [vmem:[#allocation0] sm:$0xf]
    %vm7 = vcmask 7168
    %8 = vst.msk [vmem:[%s1] ss:$3 sm:$0xf] %vm7, %v6
    %v9 = vld [vmem:[#allocation0] sm:$0xf]
    %10 = vrot.lane.b32.xlu0 %v9, 127
    %v11 = vpop.permute.xlu0 %10
    %vm12 = vcmask 7168
    %s13 = scalar_lea.vmem %s1, 1
    %14 = vst.msk [vmem:[%s13] ss:$3 sm:$0xf] %vm12, %v11
    %v15 = vld [vmem:[#allocation0] sm:$0xf]
    %16 = vrot.lane.b32.xlu0 %v15, 126
    %v17 = vpop.permute.xlu0 %16
    %vm18 = vcmask 7168
    %s19 = scalar_lea.vmem %s1, 2
    %20 = vst.msk [vmem:[%s19] ss:$3 sm:$0xf] %vm18, %v17

// kernel: final_convt2d.1
$region0: #{final_convt2d.1}
  #allocation0 [shape = 'u32[]', space=smem, size = 0x4, offset = 0x4, fixed_abs, tag = 'smem constant byte address 0x4 - core index']
  #allocation1 [shape = 'u32[72,128]{1,0:T(1,128)}', space=vmem, size = 0x9000, scoped, tag = 'internal scratch']
  #allocation2 [shape = 'f32[4,422]{1,0:T(4,128)}', space=vmem, size = 0x2000, scoped, tag = 'scratch operand']
  #allocation3 [shape = 'f32[36,384]{1,0:T(8,128)}', space=vmem, size = 0xf000, scoped, tag = 'scratch operand']
  %s0 = inlined_call_operand.hbm [shape: f32[2,4,16,16], index: 0, kind: input, shape index: {}]
  %s1 = inlined_call_operand.vmem [shape: f32[12,36], index: 1, kind: input, shape index: {}]
  %s2 = inlined_call_operand.vmem [shape: f32[12,1], index: 2, kind: input, shape index: {}]
  %s3 = inlined_call_operand.vmem [shape: f32[2,12,384], index: 3, kind: output, shape index: {}]
  %s4 = sld [smem:[#allocation0]]
  $region49: #{final_convt2d.1} parent=0
    _
  %s6 = ssub.s32 1, %s4
  %s7 = scalar_select 0, %s6, %s4
  $region1: #{final_convt2d.1} parent=0
    #allocation4 [shape = 'u8[65536]{0}', space=vmem, size = 0x10000, scoped, tag = 'input window, operand 0']
    #allocation5 [shape = 's32[2]{0}', space=sflag, size = 0x8, scoped, tag = 'scoped memory for final_convt2d.1']
    %8 = vsyncpa [#allocation5], 0
    %s9 = scalar_lea.sflag [#allocation5], 1
    %10 = vsyncpa %s9, 0
    loop: start=0, step=1, limit=4
    $region2: #{final_convt2d.1} parent=1 // loop_pre_header
      _
    $region3: #{final_convt2d.1} parent=1 // loop_header
      %s12 = sphi 0, %s16
      %p13 = scmp.ge.s32.totalorder %s12, 4
      %s22 = sphi 0, %s24
      %s25 = sphi 0, %s22
      %s26 = sphi 0, %s25
      %s42 = sphi 0, %s26
      %s46 = sphi 0, %s46
      %s48 = sphi 0, %s46
      %s49 = sphi 0, %s48
      %s63 = sphi 0, %s49
      %s67 = sphi 0, %s67
      %s69 = sphi 0, %s67
      %s70 = sphi 0, %s69
      %s84 = sphi 0, %s70
      %s90 = sphi 0, %s92
      %s93 = sphi 0, %s90
      %s94 = sphi 0, %s93
      %s110 = sphi 0, %s94
    $region4: #{final_convt2d.1} parent=1 // loop_header_branch
      %15 = sbr.rel (%p13) target = $region8
    $region5: #{final_convt2d.1} parent=1 // loop_body
      %s17 = ssub.s32 %s12, 1
      %s18 = ssub.s32 %s12, 2
      %s19 = sadd.s32 %s12, 1
      %s20 = ssub.s32 %s12, %s19
      %p21 = scmp.eq.s32.totalorder %s20, 0
      %s23 = sadd.s32 %s22, 1
      %s24 = scalar_select %p21, %s22, %s23
      %p27 = pneg %p21
      %p28 = scmp.eq.s32.totalorder %s12, 1
      %p29 = por %p27, %p28
      %p30 = scmp.ne.s32.totalorder %s22, %s25
      %p31 = scmp.eq.s32.totalorder %s12, 0
      %p32 = por %p30, %p31
      %p33 = scmp.ne.s32.totalorder %s22, %s25
      %p34 = scmp.eq.s32.totalorder %s17, 1
      %p35 = por %p33, %p34
      %p36 = scmp.ne.s32.totalorder %s25, %s26
      %p37 = scmp.eq.s32.totalorder %s17, 0
      %p38 = por %p36, %p37
      %p39 = scmp.ne.s32.totalorder %s25, %s26
      %p40 = scmp.eq.s32.totalorder %s18, 1
      %p41 = por %p39, %p40
      %p43 = scmp.ne.s32.totalorder %s26, %s42
      %p44 = scmp.eq.s32.totalorder %s18, 0
      %p45 = por %p43, %p44
      %s47 = sadd.s32 %s46, 1
      %p50 = scmp.eq.s32.totalorder %s12, 1
      %p51 = scmp.ne.s32.totalorder %s46, %s48
      %p52 = scmp.eq.s32.totalorder %s12, 0
      %p53 = por %p51, %p52
      %p54 = scmp.ne.s32.totalorder %s46, %s48
      %p55 = scmp.eq.s32.totalorder %s17, 1
      %p56 = por %p54, %p55
      %p57 = scmp.ne.s32.totalorder %s48, %s49
      %p58 = scmp.eq.s32.totalorder %s17, 0
      %p59 = por %p57, %p58
      %p60 = scmp.ne.s32.totalorder %s48, %s49
      %p61 = scmp.eq.s32.totalorder %s18, 1
      %p62 = por %p60, %p61
      %p64 = scmp.ne.s32.totalorder %s49, %s63
      %p65 = scmp.eq.s32.totalorder %s18, 0
      %p66 = por %p64, %p65
      %s68 = sadd.s32 %s67, 1
      %p71 = scmp.eq.s32.totalorder %s12, 1
      %p72 = scmp.ne.s32.totalorder %s67, %s69
      %p73 = scmp.eq.s32.totalorder %s12, 0
      %p74 = por %p72, %p73
      %p75 = scmp.ne.s32.totalorder %s67, %s69
      %p76 = scmp.eq.s32.totalorder %s17, 1
      %p77 = por %p75, %p76
      %p78 = scmp.ne.s32.totalorder %s69, %s70
      %p79 = scmp.eq.s32.totalorder %s17, 0
      %p80 = por %p78, %p79
      %p81 = scmp.ne.s32.totalorder %s69, %s70
      %p82 = scmp.eq.s32.totalorder %s18, 1
      %p83 = por %p81, %p82
      %p85 = scmp.ne.s32.totalorder %s70, %s84
      %p86 = scmp.eq.s32.totalorder %s18, 0
      %p87 = por %p85, %p86
      %s88 = ssub.s32 %s12, %s19
      %p89 = scmp.eq.s32.totalorder %s88, 0
      %s91 = sadd.s32 %s90, 1
      %s92 = scalar_select %p89, %s90, %s91
      %p95 = pneg %p89
      %p96 = scmp.eq.s32.totalorder %s12, 1
      %p97 = por %p95, %p96
      %p98 = scmp.ne.s32.totalorder %s90, %s93
      %p99 = scmp.eq.s32.totalorder %s12, 0
      %p100 = por %p98, %p99
      %p101 = scmp.ne.s32.totalorder %s90, %s93
      %p102 = scmp.eq.s32.totalorder %s17, 1
      %p103 = por %p101, %p102
      %p104 = scmp.ne.s32.totalorder %s93, %s94
      %p105 = scmp.eq.s32.totalorder %s17, 0
      %p106 = por %p104, %p105
      %p107 = scmp.ne.s32.totalorder %s93, %s94
      %p108 = scmp.eq.s32.totalorder %s18, 1
      %p109 = por %p107, %p108
      %p111 = scmp.ne.s32.totalorder %s94, %s110
      %p112 = scmp.eq.s32.totalorder %s18, 0
      %p113 = por %p111, %p112
      %p114 = scmp.le.s32.totalorder 1, %s12
      %p115 = scmp.lt.s32.totalorder %s12, 3
      %p116 = pnand %p114, %p115
      %p117 = pneg %p116
      // Predicated region
      $region9: #{final_convt2d.1} parent=5 // pred_check
        _
      $region10: #{final_convt2d.1} parent=5 // pred_check_branch
        %119 = sbr.rel (%p116) target = $region12
      $region11: #{final_convt2d.1} parent=5 // pred_region
        %s120 = ssub.s32 %s12, 1
        // Predicated region
        $region13: #{final_convt2d.1} parent=11 // pred_check
          %p121 = pneg %p59
        $region14: #{final_convt2d.1} parent=11 // pred_check_branch
          %123 = sbr.rel (%p121) target = $region16
        $region15: #{final_convt2d.1} parent=11 // pred_region
          _
        $region16: #{final_convt2d.1} parent=11 // pred_fallthru
          _
        // Predicated region
        $region17: #{final_convt2d.1} parent=11 // pred_check
          %p124 = pneg %p80
        $region18: #{final_convt2d.1} parent=11 // pred_check_branch
          %126 = sbr.rel (%p124) target = $region20
        $region19: #{final_convt2d.1} parent=11 // pred_region
          _
        $region20: #{final_convt2d.1} parent=11 // pred_fallthru
          _
      $region12: #{final_convt2d.1} parent=5 // pred_fallthru
        _
      %p127 = scmp.lt.s32.totalorder %s12, 2
      // Predicated region
      $region21: #{final_convt2d.1} parent=5 // pred_check
        %p128 = pneg %p127
      $region22: #{final_convt2d.1} parent=5 // pred_check_branch
        %130 = sbr.rel (%p128) target = $region24
      $region23: #{final_convt2d.1} parent=5 // pred_region
        // Predicated region
        $region25: #{final_convt2d.1} parent=23 // pred_check
          %p131 = pneg %p32
        $region26: #{final_convt2d.1} parent=23 // pred_check_branch
          %133 = sbr.rel (%p131) target = $region28
        $region27: #{final_convt2d.1} parent=23 // pred_region
          %s134 = sand.u32 %s22, 1
          %s135 = scalar_lea.sflag [#allocation5], %s134
          %s136 = sand.u32 %s22, 1
          %s137 = smul.addr %s136, 64
          %s138 = scalar_lea.vmem [#allocation4], %s137
          %140 = vsyncadd %s135, 0
          %s141 = smul.addr %s12, 8
          %s142 = smul.addr %s141, 8
          %s143 = scalar_lea.hbm %s0, %s142
          %s144 = sshll.u32 %s143, 4
          %s145 = int_to_ptr.hbm [resolvable:$true] %s144
          %s146 = sshll.u32 %s138, 4
          %s147 = int_to_ptr.vmem [resolvable:$true] %s146
          %152 = dma.hbm_to_vmem [thread:$0]  %s145, 1024, %s147, %s135, 128, 128, 8
        $region28: #{final_convt2d.1} parent=23 // pred_fallthru
          _
      $region24: #{final_convt2d.1} parent=5 // pred_fallthru
        _
      %p153 = scmp.le.s32.totalorder 1, %s12
      %p154 = scmp.lt.s32.totalorder %s12, 3
      %p155 = pnand %p153, %p154
      %p156 = pneg %p155
      // Predicated region
      $region29: #{final_convt2d.1} parent=5 // pred_check
        _
      $region30: #{final_convt2d.1} parent=5 // pred_check_branch
        %158 = sbr.rel (%p155) target = $region32
      $region31: #{final_convt2d.1} parent=5 // pred_region
        %s159 = ssub.s32 %s12, 1
        %s160 = sand.u32 %s25, 1
        %s161 = scalar_lea.sflag [#allocation5], %s160
        %s162 = sand.u32 %s25, 1
        %s163 = smul.addr %s162, 64
        %s164 = scalar_lea.vmem [#allocation4], %s163
        // Predicated region
        $region33: #{final_convt2d.1} parent=31 // pred_check
          %p165 = pneg %p38
        $region34: #{final_convt2d.1} parent=31 // pred_check_branch
          %167 = sbr.rel (%p165) target = $region36
        $region35: #{final_convt2d.1} parent=31 // pred_region
          %169 = dma.done %s161, 1024
        $region36: #{final_convt2d.1} parent=31 // pred_fallthru
          _
        %s170 = sand.u32 %s25, 1
        %s171 = scalar_lea.sflag [#allocation5], %s170
        %s172 = sand.u32 %s25, 1
        %s173 = smul.addr %s172, 64
        %s174 = scalar_lea.vmem [#allocation4], %s173
        %p175 = pneg %p38
        %p176 = pneg %p35
        %p177 = pneg %p59
        %p178 = pneg %p56
        %p179 = pneg %p80
        %p180 = pneg %p77
        %p181 = pneg %p106
        %p182 = pneg %p103
        %p183 = scmp.lt.s32.totalorder %s17, 1
        %s184 = scalar_select %p183, %s17, 1
        %s185 = smul.addr %s184, 6
        %s186 = smul.addr %s185, 8
        %s187 = scalar_lea.vmem %s3, %s186
        %p188 = scmp.lt.s32.totalorder %s17, 1
        %s189 = scalar_select %p188, %s17, 1
        %s190 = smul.addr %s189, 6
        %s191 = smul.addr %s190, 8
        %s192 = scalar_lea.vmem %s3, %s191
        %193 = vst [vmem:[#allocation2] sm:$0xff] 0.0
        %vm194 = vcmask 1043456
        %vm195 = vcmask 310276
        %vm196 = vmor %vm195, %vm194
        %197 = vst.msk [vmem:[#allocation2 + $0x8] sm:$0xff] %vm196, 0.0
        %v198 = vld [vmem:[%s164] sm:$0x1]
        %v199 = vld [vmem:[%s164 + $0x10] sm:$0x1]
        %v200 = vld [vmem:[%s164 + $0x20] sm:$0x1]
        %v201 = vld [vmem:[%s164 + $0x30] sm:$0x1]
        %v206 = vrot.slane %v199, 7
        %vm207 = vcmask 1041409
        %v208 = vsel %vm207, %v206, %v198
        %vm209 = vcmask 1045509
        %v210 = vsel %vm209, %v206, %v208
        %v211 = vrot.slane %v200, 6
        %vm212 = vcmask 1042434
        %v213 = vsel %vm212, %v211, %v210
        %vm214 = vcmask 1046534
        %v215 = vsel %vm214, %v211, %v213
        %v216 = vrot.slane %v201, 5
        %vm217 = vcmask 1043459
        %v218 = vsel %vm217, %v216, %v215
        %vm219 = vcmask 1047559
        %v220 = vsel %vm219, %v216, %v218
        %221 = vrot.lane.b32.xlu0 %v220, 19
        %v222 = vpop.permute.xlu0 %221
        %vm224 = vcmask 281752
        %225 = vst.msk [vmem:[#allocation2] sm:$0xf] %vm224, %v222
        %v226 = vld [vmem:[%s164 + $0x1] sm:$0x1]
        %v227 = vld [vmem:[%s164 + $0x11] sm:$0x1]
        %v228 = vld [vmem:[%s164 + $0x21] sm:$0x1]
        %v229 = vld [vmem:[%s164 + $0x31] sm:$0x1]
        %v234 = vrot.slane %v227, 7
        %v235 = vsel %vm207, %v234, %v226
        %v236 = vsel %vm209, %v234, %v235
        %v237 = vrot.slane %v228, 6
        %v238 = vsel %vm212, %v237, %v236
        %v239 = vsel %vm214, %v237, %v238
        %v240 = vrot.slane %v229, 5
        %v241 = vsel %vm217, %v240, %v239
        %v242 = vsel %vm219, %v240, %v241
        %243 = vrot.lane.b32.xlu0 %v242, 37
        %v244 = vpop.permute.xlu0 %243
        %vm246 = vcmask 429352
        %247 = vst.msk [vmem:[#allocation2] sm:$0xf] %vm246, %v244
        %v248 = vld [vmem:[%s164 + $0x2] sm:$0x1]
        %v249 = vld [vmem:[%s164 + $0x12] sm:$0x1]
        %v250 = vld [vmem:[%s164 + $0x22] sm:$0x1]
        %v251 = vld [vmem:[%s164 + $0x32] sm:$0x1]
        %v256 = vrot.slane %v249, 7
        %v257 = vsel %vm207, %v256, %v248
        %v258 = vsel %vm209, %v256, %v257
        %v259 = vrot.slane %v250, 6
        %v260 = vsel %vm212, %v259, %v258
        %v261 = vsel %vm214, %v259, %v260
        %v262 = vrot.slane %v251, 5
        %v263 = vsel %vm217, %v262, %v261
        %v264 = vsel %vm219, %v262, %v263
        %265 = vrot.lane.b32.xlu0 %v264, 55
        %v266 = vpop.permute.xlu0 %265
        %vm268 = vcmask 576952
        %269 = vst.msk [vmem:[#allocation2] sm:$0xf] %vm268, %v266
        %v270 = vld [vmem:[%s164 + $0x3] sm:$0x1]
        %v271 = vld [vmem:[%s164 + $0x13] sm:$0x1]
        %v272 = vld [vmem:[%s164 + $0x23] sm:$0x1]
        %v273 = vld [vmem:[%s164 + $0x33] sm:$0x1]
        %v278 = vrot.slane %v271, 7
        %v279 = vsel %vm207, %v278, %v270
        %v280 = vsel %vm209, %v278, %v279
        %v281 = vrot.slane %v272, 6
        %v282 = vsel %vm212, %v281, %v280
        %v283 = vsel %vm214, %v281, %v282
        %v284 = vrot.slane %v273, 5
        %v285 = vsel %vm217, %v284, %v283
        %v286 = vsel %vm219, %v284, %v285
        %287 = vrot.lane.b32.xlu0 %v286, 73
        %v288 = vpop.permute.xlu0 %287
        %vm290 = vcmask 724552
        %291 = vst.msk [vmem:[#allocation2] sm:$0xf] %vm290, %v288
        %v292 = vld [vmem:[%s164 + $0x4] sm:$0x1]
        %v293 = vld [vmem:[%s164 + $0x14] sm:$0x1]
        %v294 = vld [vmem:[%s164 + $0x24] sm:$0x1]
        %v295 = vld [vmem:[%s164 + $0x34] sm:$0x1]
        %v300 = vrot.slane %v293, 7
        %v301 = vsel %vm207, %v300, %v292
        %v302 = vsel %vm209, %v300, %v301
        %v303 = vrot.slane %v294, 6
        %v304 = vsel %vm212, %v303, %v302
        %v305 = vsel %vm214, %v303, %v304
        %v306 = vrot.slane %v295, 5
        %v307 = vsel %vm217, %v306, %v305
        %v308 = vsel %vm219, %v306, %v307
        %309 = vrot.lane.b32.xlu0 %v308, 91
        %v310 = vpop.permute.xlu0 %309
        %vm312 = vcmask 872152
        %313 = vst.msk [vmem:[#allocation2] sm:$0xf] %vm312, %v310
        %v314 = vld [vmem:[%s164 + $0x5] sm:$0x1]
        %v315 = vld [vmem:[%s164 + $0x15] sm:$0x1]
        %v316 = vld [vmem:[%s164 + $0x25] sm:$0x1]
        %v317 = vld [vmem:[%s164 + $0x35] sm:$0x1]
        %v322 = vrot.slane %v315, 7
        %v323 = vsel %vm207, %v322, %v314
        %v324 = vsel %vm209, %v322, %v323
        %v325 = vrot.slane %v316, 6
        %v326 = vsel %vm212, %v325, %v324
        %v327 = vsel %vm214, %v325, %v326
        %v328 = vrot.slane %v317, 5
        %v329 = vsel %vm217, %v328, %v327
        %v330 = vsel %vm219, %v328, %v329
        %331 = vrot.lane.b32.xlu0 %v330, 109
        %v332 = vpop.permute.xlu0 %331
        %vm334 = vcmask 1019752
        %335 = vst.msk [vmem:[#allocation2] sm:$0xf] %vm334, %v332
        %v336 = vld [vmem:[%s164 + $0x6] sm:$0x1]
        %v337 = vld [vmem:[%s164 + $0x16] sm:$0x1]
        %v338 = vld [vmem:[%s164 + $0x26] sm:$0x1]
        %v339 = vld [vmem:[%s164 + $0x36] sm:$0x1]
        %v344 = vrot.slane %v337, 7
        %v345 = vsel %vm207, %v344, %v336
        %v346 = vsel %vm209, %v344, %v345
        %v347 = vrot.slane %v338, 6
        %v348 = vsel %vm212, %v347, %v346
        %v349 = vsel %vm214, %v347, %v348
        %v350 = vrot.slane %v339, 5
        %v351 = vsel %vm217, %v350, %v349
        %v352 = vsel %vm219, %v350, %v351
        %353 = vrot.lane.b32.xlu0 %v352, 127
        %v354 = vpop.permute.xlu0 %353
        %v355 = vrot.slane %v354, 4
        %vm356 = vcmask 1039360
        %v357 = vsel %vm356, %v355, %v354
        %vm359 = vcmask 1044472
        %vm360 = vcmask 121860
        %vm361 = vmor %vm360, %vm359
        %362 = vst.msk [vmem:[#allocation2] sm:$0xff] %vm361, %v357
        %v363 = vld [vmem:[%s164 + $0x7] sm:$0x1]
        %v364 = vld [vmem:[%s164 + $0x17] sm:$0x1]
        %v365 = vld [vmem:[%s164 + $0x27] sm:$0x1]
        %v366 = vld [vmem:[%s164 + $0x37] sm:$0x1]
        %v371 = vrot.slane %v364, 7
        %v372 = vsel %vm207, %v371, %v363
        %v373 = vsel %vm209, %v371, %v372
        %v374 = vrot.slane %v365, 6
        %v375 = vsel %vm212, %v374, %v373
        %v376 = vsel %vm214, %v374, %v375
        %v377 = vrot.slane %v366, 5
        %v378 = vsel %vm217, %v377, %v376
        %v379 = vsel %vm219, %v377, %v378
        %380 = vrot.lane.b32.xlu0 %v379, 17
        %v381 = vpop.permute.xlu0 %380
        %vm383 = vcmask 265352
        %384 = vst.msk [vmem:[#allocation2 + $0x4] sm:$0xf] %vm383, %v381
        %v385 = vld [vmem:[%s164 + $0x8] sm:$0x1]
        %v386 = vld [vmem:[%s164 + $0x18] sm:$0x1]
        %v387 = vld [vmem:[%s164 + $0x28] sm:$0x1]
        %v388 = vld [vmem:[%s164 + $0x38] sm:$0x1]
        %v393 = vrot.slane %v386, 7
        %v394 = vsel %vm207, %v393, %v385
        %v395 = vsel %vm209, %v393, %v394
        %v396 = vrot.slane %v387, 6
        %v397 = vsel %vm212, %v396, %v395
        %v398 = vsel %vm214, %v396, %v397
        %v399 = vrot.slane %v388, 5
        %v400 = vsel %vm217, %v399, %v398
        %v401 = vsel %vm219, %v399, %v400
        %402 = vrot.lane.b32.xlu0 %v401, 35
        %v403 = vpop.permute.xlu0 %402
        %vm405 = vcmask 412952
        %406 = vst.msk [vmem:[#allocation2 + $0x4] sm:$0xf] %vm405, %v403
        %v407 = vld [vmem:[%s164 + $0x9] sm:$0x1]
        %v408 = vld [vmem:[%s164 + $0x19] sm:$0x1]
        %v409 = vld [vmem:[%s164 + $0x29] sm:$0x1]
        %v410 = vld [vmem:[%s164 + $0x39] sm:$0x1]
        %v415 = vrot.slane %v408, 7
        %v416 = vsel %vm207, %v415, %v407
        %v417 = vsel %vm209, %v415, %v416
        %v418 = vrot.slane %v409, 6
        %v419 = vsel %vm212, %v418, %v417
        %v420 = vsel %vm214, %v418, %v419
        %v421 = vrot.slane %v410, 5
        %v422 = vsel %vm217, %v421, %v420
        %v423 = vsel %vm219, %v421, %v422
        %424 = vrot.lane.b32.xlu0 %v423, 53
        %v425 = vpop.permute.xlu0 %424
        %vm427 = vcmask 560552
        %428 = vst.msk [vmem:[#allocation2 + $0x4] sm:$0xf] %vm427, %v425
        %v429 = vld [vmem:[%s164 + $0xa] sm:$0x1]
        %v430 = vld [vmem:[%s164 + $0x1a] sm:$0x1]
        %v431 = vld [vmem:[%s164 + $0x2a] sm:$0x1]
        %v432 = vld [vmem:[%s164 + $0x3a] sm:$0x1]
        %v437 = vrot.slane %v430, 7
        %v438 = vsel %vm207, %v437, %v429
        %v439 = vsel %vm209, %v437, %v438
        %v440 = vrot.slane %v431, 6
        %v441 = vsel %vm212, %v440, %v439
        %v442 = vsel %vm214, %v440, %v441
        %v443 = vrot.slane %v432, 5
        %v444 = vsel %vm217, %v443, %v442
        %v445 = vsel %vm219, %v443, %v444
        %446 = vrot.lane.b32.xlu0 %v445, 71
        %v447 = vpop.permute.xlu0 %446
        %vm449 = vcmask 708152
        %450 = vst.msk [vmem:[#allocation2 + $0x4] sm:$0xf] %vm449, %v447
        %v451 = vld [vmem:[%s164 + $0xb] sm:$0x1]
        %v452 = vld [vmem:[%s164 + $0x1b] sm:$0x1]
        %v453 = vld [vmem:[%s164 + $0x2b] sm:$0x1]
        %v454 = vld [vmem:[%s164 + $0x3b] sm:$0x1]
        %v459 = vrot.slane %v452, 7
        %v460 = vsel %vm207, %v459, %v451
        %v461 = vsel %vm209, %v459, %v460
        %v462 = vrot.slane %v453, 6
        %v463 = vsel %vm212, %v462, %v461
        %v464 = vsel %vm214, %v462, %v463
        %v465 = vrot.slane %v454, 5
        %v466 = vsel %vm217, %v465, %v464
        %v467 = vsel %vm219, %v465, %v466
        %468 = vrot.lane.b32.xlu0 %v467, 89
        %v469 = vpop.permute.xlu0 %468
        %vm471 = vcmask 855752
        %472 = vst.msk [vmem:[#allocation2 + $0x4] sm:$0xf] %vm471, %v469
        %v473 = vld [vmem:[%s164 + $0xc] sm:$0x1]
        %v474 = vld [vmem:[%s164 + $0x1c] sm:$0x1]
        %v475 = vld [vmem:[%s164 + $0x2c] sm:$0x1]
        %v476 = vld [vmem:[%s164 + $0x3c] sm:$0x1]
        %v481 = vrot.slane %v474, 7
        %v482 = vsel %vm207, %v481, %v473
        %v483 = vsel %vm209, %v481, %v482
        %v484 = vrot.slane %v475, 6
        %v485 = vsel %vm212, %v484, %v483
        %v486 = vsel %vm214, %v484, %v485
        %v487 = vrot.slane %v476, 5
        %v488 = vsel %vm217, %v487, %v486
        %v489 = vsel %vm219, %v487, %v488
        %490 = vrot.lane.b32.xlu0 %v489, 107
        %v491 = vpop.permute.xlu0 %490
        %vm493 = vcmask 1003352
        %494 = vst.msk [vmem:[#allocation2 + $0x4] sm:$0xf] %vm493, %v491
        %v495 = vld [vmem:[%s164 + $0xd] sm:$0x1]
        %v496 = vld [vmem:[%s164 + $0x1d] sm:$0x1]
        %v497 = vld [vmem:[%s164 + $0x2d] sm:$0x1]
        %v498 = vld [vmem:[%s164 + $0x3d] sm:$0x1]
        %v503 = vrot.slane %v496, 7
        %v504 = vsel %vm207, %v503, %v495
        %v505 = vsel %vm209, %v503, %v504
        %v506 = vrot.slane %v497, 6
        %v507 = vsel %vm212, %v506, %v505
        %v508 = vsel %vm214, %v506, %v507
        %v509 = vrot.slane %v498, 5
        %v510 = vsel %vm217, %v509, %v508
        %v511 = vsel %vm219, %v509, %v510
        %512 = vrot.lane.b32.xlu0 %v511, 125
        %v513 = vpop.permute.xlu0 %512
        %v514 = vrot.slane %v513, 4
        %vm515 = vcmask 1022976
        %v516 = vsel %vm515, %v514, %v513
        %vm518 = vcmask 1044456
        %vm519 = vcmask 105476
        %vm520 = vmor %vm519, %vm518
        %521 = vst.msk [vmem:[#allocation2 + $0x4] sm:$0xff] %vm520, %v516
        %v522 = vld [vmem:[%s164 + $0xe] sm:$0x1]
        %v523 = vld [vmem:[%s164 + $0x1e] sm:$0x1]
        %v524 = vld [vmem:[%s164 + $0x2e] sm:$0x1]
        %v525 = vld [vmem:[%s164 + $0x3e] sm:$0x1]
        %v530 = vrot.slane %v523, 7
        %v531 = vsel %vm207, %v530, %v522
        %v532 = vsel %vm209, %v530, %v531
        %v533 = vrot.slane %v524, 6
        %v534 = vsel %vm212, %v533, %v532
        %v535 = vsel %vm214, %v533, %v534
        %v536 = vrot.slane %v525, 5
        %v537 = vsel %vm217, %v536, %v535
        %v538 = vsel %vm219, %v536, %v537
        %539 = vrot.lane.b32.xlu0 %v538, 15
        %v540 = vpop.permute.xlu0 %539
        %vm542 = vcmask 248952
        %543 = vst.msk [vmem:[#allocation2 + $0x8] sm:$0xf] %vm542, %v540
        %v544 = vld [vmem:[%s164 + $0xf] sm:$0x1]
        %v545 = vld [vmem:[%s164 + $0x1f] sm:$0x1]
        %v546 = vld [vmem:[%s164 + $0x2f] sm:$0x1]
        %v547 = vld [vmem:[%s164 + $0x3f] sm:$0x1]
        %v552 = vrot.slane %v545, 7
        %v553 = vsel %vm207, %v552, %v544
        %v554 = vsel %vm209, %v552, %v553
        %v555 = vrot.slane %v546, 6
        %v556 = vsel %vm212, %v555, %v554
        %v557 = vsel %vm214, %v555, %v556
        %v558 = vrot.slane %v547, 5
        %v559 = vsel %vm217, %v558, %v557
        %v560 = vsel %vm219, %v558, %v559
        %561 = vrot.lane.b32.xlu0 %v560, 33
        %v562 = vpop.permute.xlu0 %561
        %vm564 = vcmask 396552
        %565 = vst.msk [vmem:[#allocation2 + $0x8] sm:$0xf] %vm564, %v562
        %v566 = vld [vmem:[#allocation2] sm:$0xff]
        %v567 = vld [vmem:[#allocation2 + $0x8] sm:$0xf]
        %570 = vst [vmem:[#allocation1] ss:$2 sm:$0xff] %v566
        %s571 = scalar_lea.vmem [#allocation1], 16
        %572 = vst [vmem:[%s571] ss:$2 sm:$0xff] %v567
        %v573 = vld.sshfl [vmem:[#allocation1] sm:$0xff pattern:$0x75316420]
        %v574 = vld.sshfl [vmem:[#allocation1 + $0x8] sm:$0xff pattern:$0x75316420]
        %v575 = vld.sshfl [vmem:[#allocation1 + $0x10] sm:$0xff pattern:$0x75316420]
        %579 = vst [vmem:[#allocation3] sm:$0xf] %v573
        %580 = vst [vmem:[#allocation3 + $0x8] sm:$0xf] %v574
        %581 = vst [vmem:[#allocation3 + $0x10] sm:$0xf] %v575
        %v582 = vld [vmem:[#allocation2] sm:$0xff]
        %v583 = vld [vmem:[#allocation2 + $0x8] sm:$0xff]
        %s586 = scalar_lea.vmem [#allocation1], 1
        %587 = vst [vmem:[%s586] ss:$2 sm:$0xff] %v582
        %s588 = scalar_lea.vmem [#allocation1], 17
        %589 = vst [vmem:[%s588] ss:$2 sm:$0xff] %v583
        %v590 = vld.sshfl [vmem:[#allocation1] sm:$0xff pattern:$0x75316420]
        %v591 = vld.sshfl [vmem:[#allocation1 + $0x8] sm:$0xff pattern:$0x75316420]
        %v592 = vld.sshfl [vmem:[#allocation1 + $0x10] sm:$0xff pattern:$0x75316420]
        %v593 = vld.sshfl [vmem:[#allocation1 + $0x18] sm:$0xff pattern:$0x75316420]
        %594 = vrot.lane.b32.xlu0 %v590, 127
        %v595 = vpop.permute.xlu0 %594
        %596 = vrot.lane.b32.xlu0 %v591, 127
        %v597 = vpop.permute.xlu0 %596
        %598 = vrot.lane.b32.xlu0 %v592, 127
        %v599 = vpop.permute.xlu0 %598
        %600 = vrot.lane.b32.xlu0 %v593, 127
        %v601 = vpop.permute.xlu0 %600
        %v602 = vsel %vm356, %v595, %v597
        %v603 = vsel %vm356, %v597, %v599
        %v604 = vsel %vm356, %v599, %v601
        %608 = vst [vmem:[#allocation3] sm:$0xf0] %v602
        %609 = vst [vmem:[#allocation3 + $0x8] sm:$0xf0] %v603
        %610 = vst [vmem:[#allocation3 + $0x10] sm:$0xf0] %v604
        %v611 = vld [vmem:[#allocation2] sm:$0xff]
        %v612 = vld [vmem:[#allocation2 + $0x8] sm:$0xff]
        %615 = vst [vmem:[#allocation1] ss:$2 sm:$0xff] %v611
        %s616 = scalar_lea.vmem [#allocation1], 16
        %617 = vst [vmem:[%s616] ss:$2 sm:$0xff] %v612
        %v618 = vld.sshfl [vmem:[#allocation1] sm:$0xff pattern:$0x75316420]
        %v619 = vld.sshfl [vmem:[#allocation1 + $0x8] sm:$0xff pattern:$0x75316420]
        %v620 = vld.sshfl [vmem:[#allocation1 + $0x10] sm:$0xff pattern:$0x75316420]
        %v621 = vld.sshfl [vmem:[#allocation1 + $0x18] sm:$0xff pattern:$0x75316420]
        %622 = vrot.lane.b32.xlu0 %v618, 126
        %v623 = vpop.permute.xlu0 %622
        %624 = vrot.lane.b32.xlu0 %v619, 126
        %v625 = vpop.permute.xlu0 %624
        %626 = vrot.lane.b32.xlu0 %v620, 126
        %v627 = vpop.permute.xlu0 %626
        %628 = vrot.lane.b32.xlu0 %v621, 126
        %v629 = vpop.permute.xlu0 %628
        %vm630 = vcmask 1031168
        %v631 = vsel %vm630, %v623, %v625
        %v632 = vsel %vm630, %v625, %v627
        %v633 = vsel %vm630, %v627, %v629
        %637 = vst [vmem:[#allocation3 + $0x18] sm:$0xf] %v631
        %638 = vst [vmem:[#allocation3 + $0x20] sm:$0xf] %v632
        %639 = vst [vmem:[#allocation3 + $0x28] sm:$0xf] %v633
        %v640 = vld [vmem:[#allocation2] sm:$0xff]
        %v641 = vld [vmem:[#allocation2 + $0x8] sm:$0xff]
        %s644 = scalar_lea.vmem [#allocation1], 1
        %645 = vst [vmem:[%s644] ss:$2 sm:$0xff] %v640
        %s646 = scalar_lea.vmem [#allocation1], 17
        %647 = vst [vmem:[%s646] ss:$2 sm:$0xff] %v641
        %v648 = vld.sshfl [vmem:[#allocation1] sm:$0xff pattern:$0x75316420]
        %v649 = vld.sshfl [vmem:[#allocation1 + $0x8] sm:$0xff pattern:$0x75316420]
        %v650 = vld.sshfl [vmem:[#allocation1 + $0x10] sm:$0xff pattern:$0x75316420]
        %v651 = vld.sshfl [vmem:[#allocation1 + $0x18] sm:$0xff pattern:$0x75316420]
        %652 = vrot.lane.b32.xlu0 %v648, 110
        %v653 = vpop.permute.xlu0 %652
        %654 = vrot.lane.b32.xlu0 %v649, 110
        %v655 = vpop.permute.xlu0 %654
        %656 = vrot.lane.b32.xlu0 %v650, 110
        %v657 = vpop.permute.xlu0 %656
        %658 = vrot.lane.b32.xlu0 %v651, 110
        %v659 = vpop.permute.xlu0 %658
        %vm660 = vcmask 900096
        %v661 = vsel %vm660, %v653, %v655
        %v662 = vsel %vm660, %v655, %v657
        %v663 = vsel %vm660, %v657, %v659
        %667 = vst [vmem:[#allocation3 + $0x18] sm:$0xf0] %v661
        %668 = vst [vmem:[#allocation3 + $0x20] sm:$0xf0] %v662
        %669 = vst [vmem:[#allocation3 + $0x28] sm:$0xf0] %v663
        %v670 = vld [vmem:[#allocation2] sm:$0xff]
        %v671 = vld [vmem:[#allocation2 + $0x8] sm:$0xff]
        %674 = vst [vmem:[#allocation1] ss:$2 sm:$0xff] %v670
        %s675 = scalar_lea.vmem [#allocation1], 16
        %676 = vst [vmem:[%s675] ss:$2 sm:$0xff] %v671
        %v677 = vld.sshfl [vmem:[#allocation1] sm:$0xff pattern:$0x75316420]
        %v678 = vld.sshfl [vmem:[#allocation1 + $0x8] sm:$0xff pattern:$0x75316420]
        %v679 = vld.sshfl [vmem:[#allocation1 + $0x10] sm:$0xff pattern:$0x75316420]
        %v680 = vld.sshfl [vmem:[#allocation1 + $0x18] sm:$0xff pattern:$0x75316420]
        %681 = vrot.lane.b32.xlu0 %v677, 109
        %v682 = vpop.permute.xlu0 %681
        %683 = vrot.lane.b32.xlu0 %v678, 109
        %v684 = vpop.permute.xlu0 %683
        %685 = vrot.lane.b32.xlu0 %v679, 109
        %v686 = vpop.permute.xlu0 %685
        %687 = vrot.lane.b32.xlu0 %v680, 109
        %v688 = vpop.permute.xlu0 %687
        %vm689 = vcmask 891904
        %v690 = vsel %vm689, %v682, %v684
        %v691 = vsel %vm689, %v684, %v686
        %v692 = vsel %vm689, %v686, %v688
        %696 = vst [vmem:[#allocation3 + $0x30] sm:$0xf] %v690
        %697 = vst [vmem:[#allocation3 + $0x38] sm:$0xf] %v691
        %698 = vst [vmem:[#allocation3 + $0x40] sm:$0xf] %v692
        %v699 = vld [vmem:[#allocation2] sm:$0xff]
        %v700 = vld [vmem:[#allocation2 + $0x8] sm:$0xff]
        %s703 = scalar_lea.vmem [#allocation1], 1
        %704 = vst [vmem:[%s703] ss:$2 sm:$0xff] %v699
        %s705 = scalar_lea.vmem [#allocation1], 17
        %706 = vst [vmem:[%s705] ss:$2 sm:$0xff] %v700
        %v707 = vld.sshfl [vmem:[#allocation1] sm:$0xff pattern:$0x75316420]
        %v708 = vld.sshfl [vmem:[#allocation1 + $0x8] sm:$0xff pattern:$0x75316420]
        %v709 = vld.sshfl [vmem:[#allocation1 + $0x10] sm:$0xff pattern:$0x75316420]
        %v710 = vld.sshfl [vmem:[#allocation1 + $0x18] sm:$0xff pattern:$0x75316420]
        %711 = vrot.lane.b32.xlu0 %v707, 108
        %v712 = vpop.permute.xlu0 %711
        %713 = vrot.lane.b32.xlu0 %v708, 108
        %v714 = vpop.permute.xlu0 %713
        %715 = vrot.lane.b32.xlu0 %v709, 108
        %v716 = vpop.permute.xlu0 %715
        %717 = vrot.lane.b32.xlu0 %v710, 108
        %v718 = vpop.permute.xlu0 %717
        %vm719 = vcmask 883712
        %v720 = vsel %vm719, %v712, %v714
        %v721 = vsel %vm719, %v714, %v716
        %v722 = vsel %vm719, %v716, %v718
        %726 = vst [vmem:[#allocation3 + $0x30] sm:$0xf0] %v720
        %727 = vst [vmem:[#allocation3 + $0x38] sm:$0xf0] %v721
        %728 = vst [vmem:[#allocation3 + $0x40] sm:$0xf0] %v722
        %v729 = vld [vmem:[#allocation2] sm:$0xff]
        %v730 = vld [vmem:[#allocation2 + $0x8] sm:$0xff]
        %733 = vst [vmem:[#allocation1] ss:$2 sm:$0xff] %v729
        %s734 = scalar_lea.vmem [#allocation1], 16
        %735 = vst [vmem:[%s734] ss:$2 sm:$0xff] %v730
        %v736 = vld.sshfl [vmem:[#allocation1] sm:$0xff pattern:$0x75316420]
        %v737 = vld.sshfl [vmem:[#allocation1 + $0x8] sm:$0xff pattern:$0x75316420]
        %v738 = vld.sshfl [vmem:[#allocation1 + $0x10] sm:$0xff pattern:$0x75316420]
        %v739 = vld.sshfl [vmem:[#allocation1 + $0x18] sm:$0xff pattern:$0x75316420]
        %740 = vrot.lane.b32.xlu0 %v736, 92
        %v741 = vpop.permute.xlu0 %740
        %742 = vrot.lane.b32.xlu0 %v737, 92
        %v743 = vpop.permute.xlu0 %742
        %744 = vrot.lane.b32.xlu0 %v738, 92
        %v745 = vpop.permute.xlu0 %744
        %746 = vrot.lane.b32.xlu0 %v739, 92
        %v747 = vpop.permute.xlu0 %746
        %vm748 = vcmask 752640
        %v749 = vsel %vm748, %v741, %v743
        %v750 = vsel %vm748, %v743, %v745
        %v751 = vsel %vm748, %v745, %v747
        %755 = vst [vmem:[#allocation3 + $0x48] sm:$0xf] %v749
        %756 = vst [vmem:[#allocation3 + $0x50] sm:$0xf] %v750
        %757 = vst [vmem:[#allocation3 + $0x58] sm:$0xf] %v751
        %v758 = vld [vmem:[#allocation2] sm:$0xff]
        %v759 = vld [vmem:[#allocation2 + $0x8] sm:$0xff]
        %s762 = scalar_lea.vmem [#allocation1], 1
        %763 = vst [vmem:[%s762] ss:$2 sm:$0xff] %v758
        %s764 = scalar_lea.vmem [#allocation1], 17
        %765 = vst [vmem:[%s764] ss:$2 sm:$0xff] %v759
        %v766 = vld.sshfl [vmem:[#allocation1] sm:$0xff pattern:$0x75316420]
        %v767 = vld.sshfl [vmem:[#allocation1 + $0x8] sm:$0xff pattern:$0x75316420]
        %v768 = vld.sshfl [vmem:[#allocation1 + $0x10] sm:$0xff pattern:$0x75316420]
        %v769 = vld.sshfl [vmem:[#allocation1 + $0x18] sm:$0xff pattern:$0x75316420]
        %770 = vrot.lane.b32.xlu0 %v766, 91
        %v771 = vpop.permute.xlu0 %770
        %772 = vrot.lane.b32.xlu0 %v767, 91
        %v773 = vpop.permute.xlu0 %772
        %774 = vrot.lane.b32.xlu0 %v768, 91
        %v775 = vpop.permute.xlu0 %774
        %776 = vrot.lane.b32.xlu0 %v769, 91
        %v777 = vpop.permute.xlu0 %776
        %vm778 = vcmask 744448
        %v779 = vsel %vm778, %v771, %v773
        %v780 = vsel %vm778, %v773, %v775
        %v781 = vsel %vm778, %v775, %v777
        %785 = vst [vmem:[#allocation3 + $0x48] sm:$0xf0] %v779
        %786 = vst [vmem:[#allocation3 + $0x50] sm:$0xf0] %v780
        %787 = vst [vmem:[#allocation3 + $0x58] sm:$0xf0] %v781
        %v788 = vld [vmem:[#allocation2] sm:$0xff]
        %v789 = vld [vmem:[#allocation2 + $0x8] sm:$0xff]
        %792 = vst [vmem:[#allocation1] ss:$2 sm:$0xff] %v788
        %s793 = scalar_lea.vmem [#allocation1], 16
        %794 = vst [vmem:[%s793] ss:$2 sm:$0xff] %v789
        %v795 = vld.sshfl [vmem:[#allocation1] sm:$0xff pattern:$0x75316420]
        %v796 = vld.sshfl [vmem:[#allocation1 + $0x8] sm:$0xff pattern:$0x75316420]
        %v797 = vld.sshfl [vmem:[#allocation1 + $0x10] sm:$0xff pattern:$0x75316420]
        %v798 = vld.sshfl [vmem:[#allocation1 + $0x18] sm:$0xff pattern:$0x75316420]
        %799 = vrot.lane.b32.xlu0 %v795, 90
        %v800 = vpop.permute.xlu0 %799
        %801 = vrot.lane.b32.xlu0 %v796, 90
        %v802 = vpop.permute.xlu0 %801
        %803 = vrot.lane.b32.xlu0 %v797, 90
        %v804 = vpop.permute.xlu0 %803
        %805 = vrot.lane.b32.xlu0 %v798, 90
        %v806 = vpop.permute.xlu0 %805
        %vm807 = vcmask 736256
        %v808 = vsel %vm807, %v800, %v802
        %v809 = vsel %vm807, %v802, %v804
        %v810 = vsel %vm807, %v804, %v806
        %814 = vst [vmem:[#allocation3 + $0x60] sm:$0xf] %v808
        %815 = vst [vmem:[#allocation3 + $0x68] sm:$0xf] %v809
        %816 = vst [vmem:[#allocation3 + $0x70] sm:$0xf] %v810
        %v817 = vld [vmem:[%s1] sm:$0xff]
        %v818 = vld [vmem:[%s1 + $0x8] sm:$0xf]
        %v819 = vld [vmem:[#allocation3] sm:$0xff]
        %v820 = vld [vmem:[#allocation3 + $0x8] sm:$0xff]
        %v821 = vld [vmem:[#allocation3 + $0x10] sm:$0xff]
        %v822 = vld [vmem:[#allocation3 + $0x18] sm:$0xff]
        %v823 = vld [vmem:[#allocation3 + $0x20] sm:$0xff]
        %v824 = vld [vmem:[#allocation3 + $0x28] sm:$0xff]
        %v825 = vld [vmem:[#allocation3 + $0x30] sm:$0xff]
        %v826 = vld [vmem:[#allocation3 + $0x38] sm:$0xff]
        %v827 = vld [vmem:[#allocation3 + $0x40] sm:$0xff]
        %v828 = vld [vmem:[#allocation3 + $0x48] sm:$0xff]
        %v829 = vld [vmem:[#allocation3 + $0x50] sm:$0xff]
        %v830 = vld [vmem:[#allocation3 + $0x58] sm:$0xff]
        %v831 = vld [vmem:[#allocation3 + $0x60] sm:$0xf]
        %v832 = vld [vmem:[#allocation3 + $0x68] sm:$0xf]
        %v833 = vld [vmem:[#allocation3 + $0x70] sm:$0xf]
        %v834 = vld [vmem:[%s2] sm:$0xff]
        %v835 = vld [vmem:[%s2 + $0x8] sm:$0xf]
        %837 = vset.pattern.permute.xlu0 0
        %838 = vperm.xlu0 %837, %v834
        %v839 = vpop.permute.xlu0 %838
        %842 = vset.pattern.permute.xlu0 0
        %843 = vperm.xlu0 %842, %v835
        %v844 = vpop.permute.xlu0 %843
        %vm846 = vcmask 293888
        %v848 = vsel %vm846, %v817, 0
        %v851 = vsel %vm846, %v818, 0
        %v854 = vsel %vm194, %v831, 0
        %v857 = vsel %vm194, %v832, 0
        %v860 = vsel %vm194, %v833, 0
        %862 = vmatpush.msra.mxu0 0.0
        %863 = vmatpush.msra.mxu0 0.0
        %864 = vmatpush.msra.mxu0 0.0
        %865 = vmatpush.msra.mxu0 0.0
        %866 = vmatpush.msra.mxu0 0.0
        %867 = vmatpush.msra.mxu0 0.0
        %868 = vmatpush.msra.mxu0 0.0
        %869 = vmatpush.msra.mxu0 0.0
        %870 = vmatpush.msra.mxu0 0.0
        %871 = vmatpush.msra.mxu0 0.0
        %872 = vmatpush.msra.mxu0 0.0
        %873 = vmatpush.msra.mxu0 %v854
        %874 = vmatpush.msra.mxu0 %v828
        %875 = vmatpush.msra.mxu0 %v825
        %876 = vmatpush.msra.mxu0 %v822
        %877 = vmatpush.msra.mxu0 %v819
        %878 = vmatmul.f32.gmra.mxu0 %v848
        %v879 = vpop.f32.mrf.mxu0
        %v880 = vadd.f32 %v839, %v879
        %881 = vmatmul.f32.gmra.mxu0 %v851
        %v882 = vpop.f32.mrf.mxu0
        %v883 = vadd.f32 %v844, %v882
        %884 = vdwg.mxu0
        %885 = vmatpush.msra.mxu0 0.0
        %886 = vmatpush.msra.mxu0 0.0
        %887 = vmatpush.msra.mxu0 0.0
        %888 = vmatpush.msra.mxu0 0.0
        %889 = vmatpush.msra.mxu0 0.0
        %890 = vmatpush.msra.mxu0 0.0
        %891 = vmatpush.msra.mxu0 0.0
        %892 = vmatpush.msra.mxu0 0.0
        %893 = vmatpush.msra.mxu0 0.0
        %894 = vmatpush.msra.mxu0 0.0
        %895 = vmatpush.msra.mxu0 0.0
        %896 = vmatpush.msra.mxu0 %v857
        %897 = vmatpush.msra.mxu0 %v829
        %898 = vmatpush.msra.mxu0 %v826
        %899 = vmatpush.msra.mxu0 %v823
        %900 = vmatpush.msra.mxu0 %v820
        %901 = vmatmul.f32.gmra.mxu0 %v848
        %v902 = vpop.f32.mrf.mxu0
        %v903 = vadd.f32 %v839, %v902
        %904 = vmatmul.f32.gmra.mxu0 %v851
        %v905 = vpop.f32.mrf.mxu0
        %v906 = vadd.f32 %v844, %v905
        %907 = vdwg.mxu0
        %908 = vmatpush.msra.mxu0 0.0
        %909 = vmatpush.msra.mxu0 0.0
        %910 = vmatpush.msra.mxu0 0.0
        %911 = vmatpush.msra.mxu0 0.0
        %912 = vmatpush.msra.mxu0 0.0
        %913 = vmatpush.msra.mxu0 0.0
        %914 = vmatpush.msra.mxu0 0.0
        %915 = vmatpush.msra.mxu0 0.0
        %916 = vmatpush.msra.mxu0 0.0
        %917 = vmatpush.msra.mxu0 0.0
        %918 = vmatpush.msra.mxu0 0.0
        %919 = vmatpush.msra.mxu0 %v860
        %920 = vmatpush.msra.mxu0 %v830
        %921 = vmatpush.msra.mxu0 %v827
        %922 = vmatpush.msra.mxu0 %v824
        %923 = vmatpush.msra.mxu0 %v821
        %924 = vmatmul.f32.gmra.mxu0 %v848
        %v925 = vpop.f32.mrf.mxu0
        %v926 = vadd.f32 %v839, %v925
        %927 = vmatmul.f32.gmra.mxu0 %v851
        %v928 = vpop.f32.mrf.mxu0
        %v929 = vadd.f32 %v844, %v928
        %930 = vdwg.mxu0
        %v931 = vtanh.pop %v880
        %v932 = vtanh.pop %v903
        %v933 = vtanh.pop %v926
        %v934 = vtanh.pop %v883
        %v935 = vtanh.pop %v906
        %v936 = vtanh.pop %v929
        %937 = vst [vmem:[%s192] sm:$0xff] %v931
        %938 = vst [vmem:[%s192 + $0x8] sm:$0xff] %v932
        %939 = vst [vmem:[%s192 + $0x10] sm:$0xff] %v933
        %940 = vst [vmem:[%s192 + $0x18] sm:$0xf] %v934
        %941 = vst [vmem:[%s192 + $0x20] sm:$0xf] %v935
        %942 = vst [vmem:[%s192 + $0x28] sm:$0xf] %v936
        %p943 = scmp.lt.s32.totalorder %s17, 1
        %s944 = scalar_select %p943, %s17, 1
        %s945 = smul.addr %s944, 6
        %s946 = smul.addr %s945, 8
        %s947 = scalar_lea.vmem %s3, %s946
        // Predicated region
        $region37: #{final_convt2d.1} parent=31 // pred_check
          %p948 = pneg %p103
        $region38: #{final_convt2d.1} parent=31 // pred_check_branch
          %950 = sbr.rel (%p948) target = $region40
        $region39: #{final_convt2d.1} parent=31 // pred_region
          _
        $region40: #{final_convt2d.1} parent=31 // pred_fallthru
          _
      $region32: #{final_convt2d.1} parent=5 // pred_fallthru
        _
      %p951 = scmp.le.s32.totalorder 2, %s12
      // Predicated region
      $region41: #{final_convt2d.1} parent=5 // pred_check
        %p952 = pneg %p951
      $region42: #{final_convt2d.1} parent=5 // pred_check_branch
        %954 = sbr.rel (%p952) target = $region44
      $region43: #{final_convt2d.1} parent=5 // pred_region
        %s955 = ssub.s32 %s12, 2
        // Predicated region
        $region45: #{final_convt2d.1} parent=43 // pred_check
          %p956 = pneg %p109
        $region46: #{final_convt2d.1} parent=43 // pred_check_branch
          %958 = sbr.rel (%p956) target = $region48
        $region47: #{final_convt2d.1} parent=43 // pred_region
          %p959 = scmp.lt.s32.totalorder %s18, 1
          %s960 = scalar_select %p959, %s18, 1
          %s961 = smul.addr %s960, 6
          %s962 = smul.addr %s961, 8
          %s963 = scalar_lea.vmem %s3, %s962
        $region48: #{final_convt2d.1} parent=43 // pred_fallthru
          _
      $region44: #{final_convt2d.1} parent=5 // pred_fallthru
        _
    $region6: #{final_convt2d.1} parent=1 // loop_footer
      %s16 = sadd.s32 1, %s12
    $region7: #{final_convt2d.1} parent=1 // loop_footer_branch
      %11 = sbr.rel target = $region3
    $region8: #{final_convt2d.1} parent=1 // loop_exit
      _
    %964 = vsyncpa [#allocation5], 1
    %s965 = scalar_lea.sflag [#allocation5], 1
    %966 = vsyncpa %s965, 1

</llo_original>
